<compile_context>
chip_gen: v7x
topology: tpu7x:2x2x1
jax: 0.10.0
libtpu: 0.0.40
codegen_flags: <defaults>
</compile_context>

<pallas_src>
import jax
import jax.numpy as jnp
from jax.experimental import pallas as pl
from jax.experimental.pallas import tpu as pltpu

TB = 512  # batch tile (lane width); was 128 — raised per perf feedback


def actor_kernel(x_ref, p_ref, w2_ref, o_ref):
    x = x_ref[...]                       # (1, TB): batch on lanes
    p = p_ref[...]                       # (32, 8): packed per-feature params
    w1 = p[:, 0:1]                       # fc1 weight   (32, 1)
    b1 = p[:, 1:2]                       # fc1 bias     (32, 1)
    b2 = p[:, 2:3]                       # fc2 bias     (32, 1)
    w3 = p[:, 3:4]                       # out weight   (32, 1)
    b3 = p[0:1, 4:5]                     # out bias     (1, 1)

    # Layer 1 (in_features = 1): VPU broadcast multiply + add, EUP tanh.
    # (32,1) * (1,TB) -> (32,TB) — no degenerate K=1 MXU matmul.
    h1 = jnp.tanh(w1 * x + b1)

    # Layer 2: the only real matmul, (32,32) @ (32,TB) on the MXU, f32 acc.
    h2 = jnp.dot(w2_ref[...], h1, preferred_element_type=jnp.float32)
    h2 = jnp.tanh((h2 + b2).astype(x.dtype))

    # Layer 3 (out_features = 1): elementwise mul + cross-sublane reduce
    # (XLU), accumulated in f32.  Result (1, TB) is lane-dense.
    y = jnp.sum(h2.astype(jnp.float32) * w3.astype(jnp.float32),
                axis=0, keepdims=True) + b3.astype(jnp.float32)

    o_ref[...] = y.astype(o_ref.dtype)


def prepare_params(params, dtype=jnp.float32):
    """Hoisted once: convert PyTorch-layout params (W:(out,in), b:(out,)) into
    the kernel layout.  The five (32,)/(1,) tensors are packed into a single
    (32, 8) block: columns = [w1, b1, b2, w3, b3, 0, 0, 0].
    Pass dtype=jnp.bfloat16 on v6e/v7x for ~2x tanh/VPU throughput."""
    zeros = jnp.zeros((32,), jnp.float32)
    packed = jnp.stack(
        [params["fc1_w"].reshape(32),
         params["fc1_b"].reshape(32),
         params["fc2_b"].reshape(32),
         params["out_w"].reshape(32),
         jnp.broadcast_to(params["out_b"].reshape(1), (32,)),
         zeros, zeros, zeros],
        axis=1,
    )                                                   # (32, 8)
    return {
        "packed": packed.astype(dtype),                 # w1|b1|b2|w3|b3
        "w2": params["fc2_w"].astype(dtype),            # (32, 32), y = W2 @ h
    }


def actor_forward(x, kparams, *, tb=TB):
    """x: (B, 1) float32.  kparams: output of prepare_params.  Returns (B, 1) f32."""
    B = x.shape[0]
    compute_dtype = kparams["w2"].dtype

    # Batch on the lane axis.  (B,1) -> (1,B) is a contiguous (free) reshape;
    # no jnp.pad — the ragged last tile is masked by Pallas edge handling.
    xt = x.reshape(1, B).astype(compute_dtype)

    n_tiles = pl.cdiv(B, tb)
    resident = lambda shape: pl.BlockSpec(shape, lambda i: (0, 0))

    out_t = pl.pallas_call(
        actor_kernel,
        out_shape=jax.ShapeDtypeStruct((1, B), jnp.float32),
        grid=(n_tiles,),
        in_specs=[
            pl.BlockSpec((1, tb), lambda i: (0, i)),    # x tile (pipelined)
            resident((32, 8)),                          # packed w1|b1|b2|w3|b3
            resident((32, 32)),                         # w2
        ],
        out_specs=pl.BlockSpec((1, tb), lambda i: (0, i)),
        compiler_params=pltpu.CompilerParams(
            dimension_semantics=("parallel",)),         # v7x: use both TCs
    )(xt, kparams["packed"], kparams["w2"])

    # (1,B) -> (B,1): contiguous reshape, no relayout copy.
    return out_t.reshape(B, 1)


def init_params(key):
    """Deterministic init mimicking PyTorch Linear default U(-1/sqrt(fan_in), +1/sqrt(fan_in))."""
    ks = jax.random.split(key, 6)

    def uniform(k, shape, fan_in):
        bound = 1.0 / jnp.sqrt(jnp.float32(fan_in))
        return jax.random.uniform(k, shape, jnp.float32, -bound, bound)

    return {
        "fc1_w": uniform(ks[0], (32, 1), 1),
        "fc1_b": uniform(ks[1], (32,), 1),
        "fc2_w": uniform(ks[2], (32, 32), 32),
        "fc2_b": uniform(ks[3], (32,), 32),
        "out_w": uniform(ks[4], (1, 32), 32),
        "out_b": uniform(ks[5], (1,), 32),
    }


def reference_forward(x, params):
    hi = jax.lax.Precision.HIGHEST
    h1 = jnp.tanh(jnp.dot(x, params["fc1_w"].T, precision=hi) + params["fc1_b"])
    h2 = jnp.tanh(jnp.dot(h1, params["fc2_w"].T, precision=hi) + params["fc2_b"])
    return jnp.dot(h2, params["out_w"].T, precision=hi) + params["out_b"]


if __name__ == "__main__":
    key = jax.random.PRNGKey(0)
    k_params, k_x = jax.random.split(key)

    params = init_params(k_params)
    kparams = prepare_params(params)   # layout prep hoisted, done once

    # B = 600: two 512-lane tiles (grid of 2 -> exercises the "parallel" grid
    # axis for v7x and the ragged/masked last tile), still small.
    B = 600
    x = jax.random.normal(k_x, (B, 1), jnp.float32)

    fwd = jax.jit(actor_forward)
    y = jax.block_until_ready(fwd(x, kparams))

    y_ref = reference_forward(x, params)
    assert y.shape == (B, 1)
    assert jnp.allclose(y, y_ref, atol=1e-4, rtol=1e-4), (
        float(jnp.max(jnp.abs(y - y_ref))))

    print("KERNEL_OK")
</pallas_src>

<mosaic_0001>
module attributes {stable_mosaic.version = 11 : i64} {
  func.func @actor_kernel(%arg0: i32, %arg1: memref<1x512xf32, #tpu.memory_space<vmem>>, %arg2: memref<32x8xf32, #tpu.memory_space<vmem>>, %arg3: memref<32x32xf32, #tpu.memory_space<vmem>>, %arg4: memref<1x512xf32, #tpu.memory_space<vmem>>) attributes {dimension_semantics = [#tpu.dimension_semantics<parallel>], iteration_bounds = array<i64: 2>, scalar_prefetch = 0 : i64, scratch_operands = 0 : i64, tpu.core_type = #tpu.core_type<tc>, window_params = [{transform_indices = @transform_0, window_bounds = array<i64: 1, 512>}, {pipeline_mode = #tpu.pipeline_mode<synchronous>, transform_indices = @transform_1, window_bounds = array<i64: 32, 8>}, {pipeline_mode = #tpu.pipeline_mode<synchronous>, transform_indices = @transform_2, window_bounds = array<i64: 32, 32>}, {transform_indices = @transform_3, window_bounds = array<i64: 1, 512>}]} {
    %c0 = arith.constant 0 : index
    %c0_0 = arith.constant 0 : index
    %0 = vector.load %arg1[%c0, %c0_0] : memref<1x512xf32, #tpu.memory_space<vmem>>, vector<1x512xf32>
    %c0_1 = arith.constant 0 : index
    %c0_2 = arith.constant 0 : index
    %1 = vector.load %arg2[%c0_1, %c0_2] : memref<32x8xf32, #tpu.memory_space<vmem>>, vector<32x8xf32>
    %2 = vector.extract_strided_slice %1 {offsets = [0, 0], sizes = [32, 1], strides = [1, 1]} : vector<32x8xf32> to vector<32x1xf32>
    %3 = vector.extract_strided_slice %1 {offsets = [0, 1], sizes = [32, 1], strides = [1, 1]} : vector<32x8xf32> to vector<32x1xf32>
    %4 = vector.extract_strided_slice %1 {offsets = [0, 2], sizes = [32, 1], strides = [1, 1]} : vector<32x8xf32> to vector<32x1xf32>
    %5 = vector.extract_strided_slice %1 {offsets = [0, 3], sizes = [32, 1], strides = [1, 1]} : vector<32x8xf32> to vector<32x1xf32>
    %6 = vector.extract_strided_slice %1 {offsets = [0, 4], sizes = [1, 1], strides = [1, 1]} : vector<32x8xf32> to vector<1x1xf32>
    %7 = vector.broadcast %2 : vector<32x1xf32> to vector<32x512xf32>
    %8 = vector.broadcast %0 : vector<1x512xf32> to vector<32x512xf32>
    %9 = arith.mulf %7, %8 : vector<32x512xf32>
    %10 = vector.broadcast %3 : vector<32x1xf32> to vector<32x512xf32>
    %11 = arith.addf %9, %10 : vector<32x512xf32>
    %12 = math.tanh %11 : vector<32x512xf32>
    %c0_3 = arith.constant 0 : index
    %c0_4 = arith.constant 0 : index
    %13 = vector.load %arg3[%c0_3, %c0_4] : memref<32x32xf32, #tpu.memory_space<vmem>>, vector<32x32xf32>
    %cst = arith.constant dense<0.000000e+00> : vector<32x512xf32>
    %14 = tpu.matmul %13, %12, %cst {dimension_numbers = #tpu.dot_dimension_numbers<[1], [0], [0], [1], [0, 0, 1, 1], [], []>} : vector<32x32xf32>, vector<32x512xf32>, vector<32x512xf32> -> vector<32x512xf32>
    %15 = vector.broadcast %4 : vector<32x1xf32> to vector<32x512xf32>
    %16 = arith.addf %14, %15 : vector<32x512xf32>
    %17 = math.tanh %16 : vector<32x512xf32>
    %18 = vector.broadcast %5 : vector<32x1xf32> to vector<32x512xf32>
    %19 = arith.mulf %17, %18 : vector<32x512xf32>
    %cst_5 = arith.constant dense<0.000000e+00> : vector<512xf32>
    %20 = vector.multi_reduction <add>, %19, %cst_5 [0] : vector<32x512xf32> to vector<512xf32>
    %21 = vector.shape_cast %20 : vector<512xf32> to vector<1x512xf32>
    %22 = vector.broadcast %6 : vector<1x1xf32> to vector<1x512xf32>
    %23 = arith.addf %21, %22 : vector<1x512xf32>
    %c0_6 = arith.constant 0 : index
    %c0_7 = arith.constant 0 : index
    %24 = vector.load %arg4[%c0_6, %c0_7] : memref<1x512xf32, #tpu.memory_space<vmem>>, vector<1x512xf32>
    tpu.vector_store %arg4[%c0_6, %c0_7], %23 {strides = array<i32>} : memref<1x512xf32, #tpu.memory_space<vmem>>, vector<1x512xf32>,
    return
  }
  func.func @transform_0(%arg0: i32) -> (i32, i32) {
    %c0_i32 = arith.constant 0 : i32
    %c0_i32_0 = arith.constant 0 : i32
    return %c0_i32, %arg0 : i32, i32
  }
  func.func @transform_1(%arg0: i32) -> (i32, i32) {
    %c0_i32 = arith.constant 0 : i32
    %c0_i32_0 = arith.constant 0 : i32
    %c0_i32_1 = arith.constant 0 : i32
    return %c0_i32, %c0_i32_0 : i32, i32
  }
  func.func @transform_2(%arg0: i32) -> (i32, i32) {
    %c0_i32 = arith.constant 0 : i32
    %c0_i32_0 = arith.constant 0 : i32
    %c0_i32_1 = arith.constant 0 : i32
    return %c0_i32, %c0_i32_0 : i32, i32
  }
  func.func @transform_3(%arg0: i32) -> (i32, i32) {
    %c0_i32 = arith.constant 0 : i32
    %c0_i32_0 = arith.constant 0 : i32
    return %c0_i32, %arg0 : i32, i32
  }
}

</mosaic_0001>

<llo_original>
// kernel: actor_forward.1
$region0: #{actor_forward.1}
  #allocation0 [shape = 'u32[]', space=smem, size = 0x4, offset = 0x4, fixed_abs, tag = 'smem constant byte address 0x4 - core index']
  #allocation1 [shape = 'u32[144,128]{1,0:T(1,128)}', space=vmem, size = 0x12000, scoped, tag = 'internal scratch']
  %s0 = inlined_call_operand.vmem [shape: f32[1,600], index: 0, kind: input, shape index: {}]
  %s1 = inlined_call_operand.vmem [shape: f32[32,8], index: 1, kind: input, shape index: {}]
  %s2 = inlined_call_operand.vmem [shape: f32[32,32], index: 2, kind: input, shape index: {}]
  %s3 = inlined_call_operand.hbm [shape: f32[1,600], index: 3, kind: output, shape index: {}]
  %s4 = sld [smem:[#allocation0]]
  $region45: #{actor_forward.1} parent=0
    _
  %s6 = ssub.s32 1, %s4
  %s7 = scalar_select 0, %s6, %s4
  $region1: #{actor_forward.1} parent=0
    #allocation2 [shape = 'u8[4096]{0}', space=vmem, size = 0x1000, scoped, tag = 'output window, operand 0']
    #allocation3 [shape = 's32[2]{0}', space=sflag, size = 0x8, scoped, tag = 'scoped memory for actor_forward.1']
    %8 = vsyncpa [#allocation3], 0
    %s9 = scalar_lea.sflag [#allocation3], 1
    %10 = vsyncpa %s9, 0
    loop: start=0, step=1, limit=4
    $region2: #{actor_forward.1} parent=1 // loop_pre_header
      _
    $region3: #{actor_forward.1} parent=1 // loop_header
      %s12 = sphi 0, %s16
      %p13 = scmp.ge.s32.totalorder %s12, 4
      %s22 = sphi 0, %s24
      %s25 = sphi 0, %s22
      %s26 = sphi 0, %s25
      %s42 = sphi 0, %s26
      %s46 = sphi 0, %s46
      %s48 = sphi 0, %s46
      %s49 = sphi 0, %s48
      %s63 = sphi 0, %s49
      %s67 = sphi 0, %s67
      %s69 = sphi 0, %s67
      %s70 = sphi 0, %s69
      %s84 = sphi 0, %s70
      %s90 = sphi 0, %s92
      %s93 = sphi 0, %s90
      %s94 = sphi 0, %s93
      %s110 = sphi 0, %s94
    $region4: #{actor_forward.1} parent=1 // loop_header_branch
      %15 = sbr.rel (%p13) target = $region8
    $region5: #{actor_forward.1} parent=1 // loop_body
      %s17 = ssub.s32 %s12, 1
      %s18 = ssub.s32 %s12, 2
      %s19 = sadd.s32 %s12, 1
      %s20 = ssub.s32 %s12, %s19
      %p21 = scmp.eq.s32.totalorder %s20, 0
      %s23 = sadd.s32 %s22, 1
      %s24 = scalar_select %p21, %s22, %s23
      %p27 = pneg %p21
      %p28 = scmp.eq.s32.totalorder %s12, 1
      %p29 = por %p27, %p28
      %p30 = scmp.ne.s32.totalorder %s22, %s25
      %p31 = scmp.eq.s32.totalorder %s12, 0
      %p32 = por %p30, %p31
      %p33 = scmp.ne.s32.totalorder %s22, %s25
      %p34 = scmp.eq.s32.totalorder %s17, 1
      %p35 = por %p33, %p34
      %p36 = scmp.ne.s32.totalorder %s25, %s26
      %p37 = scmp.eq.s32.totalorder %s17, 0
      %p38 = por %p36, %p37
      %p39 = scmp.ne.s32.totalorder %s25, %s26
      %p40 = scmp.eq.s32.totalorder %s18, 1
      %p41 = por %p39, %p40
      %p43 = scmp.ne.s32.totalorder %s26, %s42
      %p44 = scmp.eq.s32.totalorder %s18, 0
      %p45 = por %p43, %p44
      %s47 = sadd.s32 %s46, 1
      %p50 = scmp.eq.s32.totalorder %s12, 1
      %p51 = scmp.ne.s32.totalorder %s46, %s48
      %p52 = scmp.eq.s32.totalorder %s12, 0
      %p53 = por %p51, %p52
      %p54 = scmp.ne.s32.totalorder %s46, %s48
      %p55 = scmp.eq.s32.totalorder %s17, 1
      %p56 = por %p54, %p55
      %p57 = scmp.ne.s32.totalorder %s48, %s49
      %p58 = scmp.eq.s32.totalorder %s17, 0
      %p59 = por %p57, %p58
      %p60 = scmp.ne.s32.totalorder %s48, %s49
      %p61 = scmp.eq.s32.totalorder %s18, 1
      %p62 = por %p60, %p61
      %p64 = scmp.ne.s32.totalorder %s49, %s63
      %p65 = scmp.eq.s32.totalorder %s18, 0
      %p66 = por %p64, %p65
      %s68 = sadd.s32 %s67, 1
      %p71 = scmp.eq.s32.totalorder %s12, 1
      %p72 = scmp.ne.s32.totalorder %s67, %s69
      %p73 = scmp.eq.s32.totalorder %s12, 0
      %p74 = por %p72, %p73
      %p75 = scmp.ne.s32.totalorder %s67, %s69
      %p76 = scmp.eq.s32.totalorder %s17, 1
      %p77 = por %p75, %p76
      %p78 = scmp.ne.s32.totalorder %s69, %s70
      %p79 = scmp.eq.s32.totalorder %s17, 0
      %p80 = por %p78, %p79
      %p81 = scmp.ne.s32.totalorder %s69, %s70
      %p82 = scmp.eq.s32.totalorder %s18, 1
      %p83 = por %p81, %p82
      %p85 = scmp.ne.s32.totalorder %s70, %s84
      %p86 = scmp.eq.s32.totalorder %s18, 0
      %p87 = por %p85, %p86
      %s88 = ssub.s32 %s12, %s19
      %p89 = scmp.eq.s32.totalorder %s88, 0
      %s91 = sadd.s32 %s90, 1
      %s92 = scalar_select %p89, %s90, %s91
      %p95 = pneg %p89
      %p96 = scmp.eq.s32.totalorder %s12, 1
      %p97 = por %p95, %p96
      %p98 = scmp.ne.s32.totalorder %s90, %s93
      %p99 = scmp.eq.s32.totalorder %s12, 0
      %p100 = por %p98, %p99
      %p101 = scmp.ne.s32.totalorder %s90, %s93
      %p102 = scmp.eq.s32.totalorder %s17, 1
      %p103 = por %p101, %p102
      %p104 = scmp.ne.s32.totalorder %s93, %s94
      %p105 = scmp.eq.s32.totalorder %s17, 0
      %p106 = por %p104, %p105
      %p107 = scmp.ne.s32.totalorder %s93, %s94
      %p108 = scmp.eq.s32.totalorder %s18, 1
      %p109 = por %p107, %p108
      %p111 = scmp.ne.s32.totalorder %s94, %s110
      %p112 = scmp.eq.s32.totalorder %s18, 0
      %p113 = por %p111, %p112
      %p114 = scmp.le.s32.totalorder 1, %s12
      %p115 = scmp.lt.s32.totalorder %s12, 3
      %p116 = pnand %p114, %p115
      %p117 = pneg %p116
      // Predicated region
      $region9: #{actor_forward.1} parent=5 // pred_check
        _
      $region10: #{actor_forward.1} parent=5 // pred_check_branch
        %119 = sbr.rel (%p116) target = $region12
      $region11: #{actor_forward.1} parent=5 // pred_region
        %s120 = ssub.s32 %s12, 1
        // Predicated region
        $region13: #{actor_forward.1} parent=11 // pred_check
          %p121 = pneg %p59
        $region14: #{actor_forward.1} parent=11 // pred_check_branch
          %123 = sbr.rel (%p121) target = $region16
        $region15: #{actor_forward.1} parent=11 // pred_region
          _
        $region16: #{actor_forward.1} parent=11 // pred_fallthru
          _
        // Predicated region
        $region17: #{actor_forward.1} parent=11 // pred_check
          %p124 = pneg %p80
        $region18: #{actor_forward.1} parent=11 // pred_check_branch
          %126 = sbr.rel (%p124) target = $region20
        $region19: #{actor_forward.1} parent=11 // pred_region
          _
        $region20: #{actor_forward.1} parent=11 // pred_fallthru
          _
      $region12: #{actor_forward.1} parent=5 // pred_fallthru
        _
      %p127 = scmp.lt.s32.totalorder %s12, 2
      // Predicated region
      $region21: #{actor_forward.1} parent=5 // pred_check
        %p128 = pneg %p127
      $region22: #{actor_forward.1} parent=5 // pred_check_branch
        %130 = sbr.rel (%p128) target = $region24
      $region23: #{actor_forward.1} parent=5 // pred_region
        // Predicated region
        $region25: #{actor_forward.1} parent=23 // pred_check
          %p131 = pneg %p32
        $region26: #{actor_forward.1} parent=23 // pred_check_branch
          %133 = sbr.rel (%p131) target = $region28
        $region27: #{actor_forward.1} parent=23 // pred_region
          %s134 = smul.u32 4, %s12
          %s135 = ssub.s32 5, %s134
          %p136 = scmp.lt.s32.totalorder %s135, 4
          %s137 = scalar_select %p136, %s135, 4
          %s138 = smul.u32 16, %s137
          %p139 = scmp.lt.s32.totalorder %s134, 4
          %s140 = scalar_select %p139, %s134, 4
          %s141 = scalar_lea.vmem %s0, %s140
          %s142 = smul.u32 4, %s12
          %s143 = ssub.s32 5, %s142
          %p144 = scmp.lt.s32.totalorder %s143, 4
          %s145 = scalar_select %p144, %s143, 4
          %s146 = smul.u32 16, %s145
        $region28: #{actor_forward.1} parent=23 // pred_fallthru
          _
      $region24: #{actor_forward.1} parent=5 // pred_fallthru
        _
      %p147 = scmp.le.s32.totalorder 1, %s12
      %p148 = scmp.lt.s32.totalorder %s12, 3
      %p149 = pnand %p147, %p148
      %p150 = pneg %p149
      // Predicated region
      $region29: #{actor_forward.1} parent=5 // pred_check
        _
      $region30: #{actor_forward.1} parent=5 // pred_check_branch
        %152 = sbr.rel (%p149) target = $region32
      $region31: #{actor_forward.1} parent=5 // pred_region
        %s153 = ssub.s32 %s12, 1
        %s154 = smul.u32 4, %s17
        %s155 = ssub.s32 5, %s154
        %p156 = scmp.lt.s32.totalorder %s155, 4
        %s157 = scalar_select %p156, %s155, 4
        %s158 = smul.u32 16, %s157
        %p159 = scmp.lt.s32.totalorder %s154, 4
        %s160 = scalar_select %p159, %s154, 4
        %s161 = scalar_lea.vmem %s0, %s160
        %p162 = pneg %p38
        %p163 = pneg %p35
        %p164 = pneg %p59
        %p165 = pneg %p56
        %p166 = pneg %p80
        %p167 = pneg %p77
        %p168 = pneg %p106
        %p169 = pneg %p103
        %s170 = sand.u32 %s93, 1
        %s171 = scalar_lea.sflag [#allocation3], %s170
        %s172 = sand.u32 %s93, 1
        %s173 = smul.addr %s172, 4
        %s174 = scalar_lea.vmem [#allocation2], %s173
        %s175 = smul.u32 4, %s17
        %s176 = ssub.s32 5, %s175
        %p177 = scmp.lt.s32.totalorder %s176, 4
        %s178 = scalar_select %p177, %s176, 4
        %s179 = smul.u32 16, %s178
        %p180 = scmp.lt.s32.totalorder %s175, 4
        %s181 = scalar_select %p180, %s175, 4
        %s182 = scalar_lea.vmem %s0, %s181
        %s183 = smul.u32 4, %s17
        %s184 = ssub.s32 5, %s183
        %p185 = scmp.lt.s32.totalorder %s184, 4
        %s186 = scalar_select %p185, %s184, 4
        %s187 = smul.u32 16, %s186
        %s188 = smul.u32 4, %s17
        %s189 = ssub.s32 5, %s188
        %p190 = scmp.lt.s32.totalorder %s189, 4
        %s191 = scalar_select %p190, %s189, 4
        %s192 = smul.u32 16, %s191
        %v193 = vld [vmem:[%s182] sm:$0xf]
        %v194 = vld [vmem:[%s1] sm:$0xff]
        %v195 = vld [vmem:[%s1 + $0x8] sm:$0xff]
        %v196 = vld [vmem:[%s1 + $0x10] sm:$0xff]
        %v197 = vld [vmem:[%s1 + $0x18] sm:$0xff]
        %199 = vset.pattern.permute.xlu0 0
        %200 = vperm.xlu0 %199, %v194
        %v201 = vpop.permute.xlu0 %200
        %204 = vset.pattern.permute.xlu0 0
        %205 = vperm.xlu0 %204, %v195
        %v206 = vpop.permute.xlu0 %205
        %209 = vset.pattern.permute.xlu0 0
        %210 = vperm.xlu0 %209, %v196
        %v211 = vpop.permute.xlu0 %210
        %214 = vset.pattern.permute.xlu0 0
        %215 = vperm.xlu0 %214, %v197
        %v216 = vpop.permute.xlu0 %215
        %v219 = vlaneseq
        %v220 = vshrl.u32 %v219, 7
        %v221 = vsub.s32 0, %v220
        %v222 = vrot.slane %v193, %v221
        %v223 = vlaneseq
        %v224 = vshrl.u32 %v223, 7
        %v225 = vsub.s32 1, %v224
        %v226 = vrot.slane %v193, %v225
        %v227 = vlaneseq
        %v228 = vshrl.u32 %v227, 7
        %v229 = vsub.s32 2, %v228
        %v230 = vrot.slane %v193, %v229
        %v231 = vlaneseq
        %v232 = vshrl.u32 %v231, 7
        %v233 = vsub.s32 3, %v232
        %v234 = vrot.slane %v193, %v233
        %v239 = vmul.f32 %v201, %v222
        %v240 = vmul.f32 %v201, %v226
        %v241 = vmul.f32 %v201, %v230
        %v242 = vmul.f32 %v201, %v234
        %v243 = vmul.f32 %v206, %v222
        %v244 = vmul.f32 %v206, %v226
        %v245 = vmul.f32 %v206, %v230
        %v246 = vmul.f32 %v206, %v234
        %v247 = vmul.f32 %v211, %v222
        %v248 = vmul.f32 %v211, %v226
        %v249 = vmul.f32 %v211, %v230
        %v250 = vmul.f32 %v211, %v234
        %v251 = vmul.f32 %v216, %v222
        %v252 = vmul.f32 %v216, %v226
        %v253 = vmul.f32 %v216, %v230
        %v254 = vmul.f32 %v216, %v234
        %255 = vset.pattern.permute.xlu0 1
        %256 = vperm.xlu0 %255, %v194
        %v257 = vpop.permute.xlu0 %256
        %259 = vset.pattern.permute.xlu0 1
        %260 = vperm.xlu0 %259, %v195
        %v261 = vpop.permute.xlu0 %260
        %263 = vset.pattern.permute.xlu0 1
        %264 = vperm.xlu0 %263, %v196
        %v265 = vpop.permute.xlu0 %264
        %267 = vset.pattern.permute.xlu0 1
        %268 = vperm.xlu0 %267, %v197
        %v269 = vpop.permute.xlu0 %268
        %v271 = vadd.f32 %v239, %v257
        %v272 = vadd.f32 %v240, %v257
        %v273 = vadd.f32 %v241, %v257
        %v274 = vadd.f32 %v242, %v257
        %v275 = vadd.f32 %v243, %v261
        %v276 = vadd.f32 %v244, %v261
        %v277 = vadd.f32 %v245, %v261
        %v278 = vadd.f32 %v246, %v261
        %v279 = vadd.f32 %v247, %v265
        %v280 = vadd.f32 %v248, %v265
        %v281 = vadd.f32 %v249, %v265
        %v282 = vadd.f32 %v250, %v265
        %v283 = vadd.f32 %v251, %v269
        %v284 = vadd.f32 %v252, %v269
        %v285 = vadd.f32 %v253, %v269
        %v286 = vadd.f32 %v254, %v269
        %v287 = vtanh.pop %v271
        %v288 = vtanh.pop %v272
        %v289 = vtanh.pop %v273
        %v290 = vtanh.pop %v274
        %v291 = vtanh.pop %v275
        %v292 = vtanh.pop %v276
        %v293 = vtanh.pop %v277
        %v294 = vtanh.pop %v278
        %v295 = vtanh.pop %v279
        %v296 = vtanh.pop %v280
        %v297 = vtanh.pop %v281
        %v298 = vtanh.pop %v282
        %v299 = vtanh.pop %v283
        %v300 = vtanh.pop %v284
        %v301 = vtanh.pop %v285
        %v302 = vtanh.pop %v286
        %v303 = vld [vmem:[%s2] sm:$0xff]
        %v304 = vld [vmem:[%s2 + $0x8] sm:$0xff]
        %v305 = vld [vmem:[%s2 + $0x10] sm:$0xff]
        %v306 = vld [vmem:[%s2 + $0x18] sm:$0xff]
        %307 = vset.pattern.permute.xlu0 2
        %308 = vperm.xlu0 %307, %v194
        %v309 = vpop.permute.xlu0 %308
        %311 = vset.pattern.permute.xlu0 2
        %312 = vperm.xlu0 %311, %v195
        %v313 = vpop.permute.xlu0 %312
        %315 = vset.pattern.permute.xlu0 2
        %316 = vperm.xlu0 %315, %v196
        %v317 = vpop.permute.xlu0 %316
        %319 = vset.pattern.permute.xlu0 2
        %320 = vperm.xlu0 %319, %v197
        %v321 = vpop.permute.xlu0 %320
        %vm323 = vcmask 261120
        %v325 = vsel %vm323, %v303, 0
        %v328 = vsel %vm323, %v304, 0
        %v331 = vsel %vm323, %v305, 0
        %v334 = vsel %vm323, %v306, 0
        %336 = vmatprep.subr.mxu0 %v288
        %337 = vmatpush1.msra.mxu0 %v287
        %338 = vmatprep.subr.mxu0 %v292
        %339 = vmatpush1.msra.mxu0 %v291
        %340 = vmatprep.subr.mxu0 %v296
        %341 = vmatpush1.msra.mxu0 %v295
        %342 = vmatprep.subr.mxu0 %v300
        %343 = vmatpush1.msra.mxu0 %v299
        %344 = vmatprep.subr.mxu0 0.0
        %345 = vmatpush1.msra.mxu0 0.0
        %346 = vmatprep.subr.mxu0 0.0
        %347 = vmatpush1.msra.mxu0 0.0
        %348 = vmatprep.subr.mxu0 0.0
        %349 = vmatpush1.msra.mxu0 0.0
        %350 = vmatprep.subr.mxu0 0.0
        %351 = vmatpush1.msra.mxu0 0.0
        %352 = vmatprep.subr.mxu0 0.0
        %353 = vmatpush1.msra.mxu0 0.0
        %354 = vmatprep.subr.mxu0 0.0
        %355 = vmatpush1.msra.mxu0 0.0
        %356 = vmatprep.subr.mxu0 0.0
        %357 = vmatpush1.msra.mxu0 0.0
        %358 = vmatprep.subr.mxu0 0.0
        %359 = vmatpush1.msra.mxu0 0.0
        %360 = vmatprep.subr.mxu0 0.0
        %361 = vmatpush1.msra.mxu0 0.0
        %362 = vmatprep.subr.mxu0 0.0
        %363 = vmatpush1.msra.mxu0 0.0
        %364 = vmatprep.subr.mxu0 0.0
        %365 = vmatpush1.msra.mxu0 0.0
        %366 = vmatprep.subr.mxu0 0.0
        %367 = vmatpush1.msra.mxu0 0.0
        %368 = vmatprep.subr.mxu0 0.0
        %369 = vmatpush1.msra.mxu0 0.0
        %370 = vmatprep.subr.mxu0 0.0
        %371 = vmatpush1.msra.mxu0 0.0
        %372 = vmatprep.subr.mxu0 0.0
        %373 = vmatpush1.msra.mxu0 0.0
        %374 = vmatprep.subr.mxu0 0.0
        %375 = vmatpush1.msra.mxu0 0.0
        %376 = vmatprep.subr.mxu0 0.0
        %377 = vmatpush1.msra.mxu0 0.0
        %378 = vmatprep.subr.mxu0 0.0
        %379 = vmatpush1.msra.mxu0 0.0
        %380 = vmatprep.subr.mxu0 0.0
        %381 = vmatpush1.msra.mxu0 0.0
        %382 = vmatprep.subr.mxu0 0.0
        %383 = vmatpush1.msra.mxu0 0.0
        %384 = vmatprep.subr.mxu0 0.0
        %385 = vmatpush1.msra.mxu0 0.0
        %386 = vmatprep.subr.mxu0 0.0
        %387 = vmatpush1.msra.mxu0 0.0
        %388 = vmatprep.subr.mxu0 0.0
        %389 = vmatpush1.msra.mxu0 0.0
        %390 = vmatprep.subr.mxu0 0.0
        %391 = vmatpush1.msra.mxu0 0.0
        %392 = vmatprep.subr.mxu0 0.0
        %393 = vmatpush1.msra.mxu0 0.0
        %394 = vmatprep.subr.mxu0 0.0
        %395 = vmatpush1.msra.mxu0 0.0
        %396 = vmatprep.subr.mxu0 0.0
        %397 = vmatpush1.msra.mxu0 0.0
        %398 = vmatprep.subr.mxu0 0.0
        %399 = vmatpush1.msra.mxu0 0.0
        %400 = vmatprep.mubr.f32.mxu0 0.0
        %401 = vmatmul.mubr.f32.gmra.mrb[0].mxu0 %v325
        %v402 = vpop.f32.mrb[0].mxu0
        %v403 = vadd.f32 %v309, %v402
        %v404 = vpop.f32.mrb[0].mxu0
        %v405 = vadd.f32 %v309, %v404
        %406 = vmatprep.mubr.f32.mxu0 0.0
        %407 = vmatmul.mubr.f32.gmra.mrb[0].mxu0 %v328
        %v408 = vpop.f32.mrb[0].mxu0
        %v409 = vadd.f32 %v313, %v408
        %v410 = vpop.f32.mrb[0].mxu0
        %v411 = vadd.f32 %v313, %v410
        %412 = vmatprep.mubr.f32.mxu0 0.0
        %413 = vmatmul.mubr.f32.gmra.mrb[0].mxu0 %v331
        %v414 = vpop.f32.mrb[0].mxu0
        %v415 = vadd.f32 %v317, %v414
        %v416 = vpop.f32.mrb[0].mxu0
        %v417 = vadd.f32 %v317, %v416
        %418 = vmatprep.mubr.f32.mxu0 0.0
        %419 = vmatmul.mubr.f32.gmra.mrb[0].mxu0 %v334
        %v420 = vpop.f32.mrb[0].mxu0
        %v421 = vadd.f32 %v321, %v420
        %v422 = vpop.f32.mrb[0].mxu0
        %v423 = vadd.f32 %v321, %v422
        %424 = vdwg.mxu0
        %425 = vmatprep.subr.mxu0 %v290
        %426 = vmatpush1.msra.mxu0 %v289
        %427 = vmatprep.subr.mxu0 %v294
        %428 = vmatpush1.msra.mxu0 %v293
        %429 = vmatprep.subr.mxu0 %v298
        %430 = vmatpush1.msra.mxu0 %v297
        %431 = vmatprep.subr.mxu0 %v302
        %432 = vmatpush1.msra.mxu0 %v301
        %433 = vmatprep.subr.mxu0 0.0
        %434 = vmatpush1.msra.mxu0 0.0
        %435 = vmatprep.subr.mxu0 0.0
        %436 = vmatpush1.msra.mxu0 0.0
        %437 = vmatprep.subr.mxu0 0.0
        %438 = vmatpush1.msra.mxu0 0.0
        %439 = vmatprep.subr.mxu0 0.0
        %440 = vmatpush1.msra.mxu0 0.0
        %441 = vmatprep.subr.mxu0 0.0
        %442 = vmatpush1.msra.mxu0 0.0
        %443 = vmatprep.subr.mxu0 0.0
        %444 = vmatpush1.msra.mxu0 0.0
        %445 = vmatprep.subr.mxu0 0.0
        %446 = vmatpush1.msra.mxu0 0.0
        %447 = vmatprep.subr.mxu0 0.0
        %448 = vmatpush1.msra.mxu0 0.0
        %449 = vmatprep.subr.mxu0 0.0
        %450 = vmatpush1.msra.mxu0 0.0
        %451 = vmatprep.subr.mxu0 0.0
        %452 = vmatpush1.msra.mxu0 0.0
        %453 = vmatprep.subr.mxu0 0.0
        %454 = vmatpush1.msra.mxu0 0.0
        %455 = vmatprep.subr.mxu0 0.0
        %456 = vmatpush1.msra.mxu0 0.0
        %457 = vmatprep.subr.mxu0 0.0
        %458 = vmatpush1.msra.mxu0 0.0
        %459 = vmatprep.subr.mxu0 0.0
        %460 = vmatpush1.msra.mxu0 0.0
        %461 = vmatprep.subr.mxu0 0.0
        %462 = vmatpush1.msra.mxu0 0.0
        %463 = vmatprep.subr.mxu0 0.0
        %464 = vmatpush1.msra.mxu0 0.0
        %465 = vmatprep.subr.mxu0 0.0
        %466 = vmatpush1.msra.mxu0 0.0
        %467 = vmatprep.subr.mxu0 0.0
        %468 = vmatpush1.msra.mxu0 0.0
        %469 = vmatprep.subr.mxu0 0.0
        %470 = vmatpush1.msra.mxu0 0.0
        %471 = vmatprep.subr.mxu0 0.0
        %472 = vmatpush1.msra.mxu0 0.0
        %473 = vmatprep.subr.mxu0 0.0
        %474 = vmatpush1.msra.mxu0 0.0
        %475 = vmatprep.subr.mxu0 0.0
        %476 = vmatpush1.msra.mxu0 0.0
        %477 = vmatprep.subr.mxu0 0.0
        %478 = vmatpush1.msra.mxu0 0.0
        %479 = vmatprep.subr.mxu0 0.0
        %480 = vmatpush1.msra.mxu0 0.0
        %481 = vmatprep.subr.mxu0 0.0
        %482 = vmatpush1.msra.mxu0 0.0
        %483 = vmatprep.subr.mxu0 0.0
        %484 = vmatpush1.msra.mxu0 0.0
        %485 = vmatprep.subr.mxu0 0.0
        %486 = vmatpush1.msra.mxu0 0.0
        %487 = vmatprep.subr.mxu0 0.0
        %488 = vmatpush1.msra.mxu0 0.0
        %489 = vmatprep.mubr.f32.mxu0 0.0
        %490 = vmatmul.mubr.f32.gmra.mrb[0].mxu0 %v325
        %v491 = vpop.f32.mrb[0].mxu0
        %v492 = vadd.f32 %v309, %v491
        %v493 = vpop.f32.mrb[0].mxu0
        %v494 = vadd.f32 %v309, %v493
        %495 = vmatprep.mubr.f32.mxu0 0.0
        %496 = vmatmul.mubr.f32.gmra.mrb[0].mxu0 %v328
        %v497 = vpop.f32.mrb[0].mxu0
        %v498 = vadd.f32 %v313, %v497
        %v499 = vpop.f32.mrb[0].mxu0
        %v500 = vadd.f32 %v313, %v499
        %501 = vmatprep.mubr.f32.mxu0 0.0
        %502 = vmatmul.mubr.f32.gmra.mrb[0].mxu0 %v331
        %v503 = vpop.f32.mrb[0].mxu0
        %v504 = vadd.f32 %v317, %v503
        %v505 = vpop.f32.mrb[0].mxu0
        %v506 = vadd.f32 %v317, %v505
        %507 = vmatprep.mubr.f32.mxu0 0.0
        %508 = vmatmul.mubr.f32.gmra.mrb[0].mxu0 %v334
        %v509 = vpop.f32.mrb[0].mxu0
        %v510 = vadd.f32 %v321, %v509
        %v511 = vpop.f32.mrb[0].mxu0
        %v512 = vadd.f32 %v321, %v511
        %513 = vdwg.mxu0
        %v514 = vtanh.pop %v403
        %v515 = vtanh.pop %v405
        %v516 = vtanh.pop %v492
        %v517 = vtanh.pop %v494
        %v518 = vtanh.pop %v409
        %v519 = vtanh.pop %v411
        %v520 = vtanh.pop %v498
        %v521 = vtanh.pop %v500
        %v522 = vtanh.pop %v415
        %v523 = vtanh.pop %v417
        %v524 = vtanh.pop %v504
        %v525 = vtanh.pop %v506
        %v526 = vtanh.pop %v421
        %v527 = vtanh.pop %v423
        %v528 = vtanh.pop %v510
        %v529 = vtanh.pop %v512
        %530 = vset.pattern.permute.xlu0 3
        %531 = vperm.xlu0 %530, %v194
        %v532 = vpop.permute.xlu0 %531
        %534 = vset.pattern.permute.xlu0 3
        %535 = vperm.xlu0 %534, %v195
        %v536 = vpop.permute.xlu0 %535
        %538 = vset.pattern.permute.xlu0 3
        %539 = vperm.xlu0 %538, %v196
        %v540 = vpop.permute.xlu0 %539
        %542 = vset.pattern.permute.xlu0 3
        %543 = vperm.xlu0 %542, %v197
        %v544 = vpop.permute.xlu0 %543
        %v546 = vmul.f32 %v514, %v532
        %v547 = vmul.f32 %v515, %v532
        %v548 = vmul.f32 %v516, %v532
        %v549 = vmul.f32 %v517, %v532
        %v550 = vmul.f32 %v518, %v536
        %v551 = vmul.f32 %v519, %v536
        %v552 = vmul.f32 %v520, %v536
        %v553 = vmul.f32 %v521, %v536
        %v554 = vmul.f32 %v522, %v540
        %v555 = vmul.f32 %v523, %v540
        %v556 = vmul.f32 %v524, %v540
        %v557 = vmul.f32 %v525, %v540
        %v558 = vmul.f32 %v526, %v544
        %v559 = vmul.f32 %v527, %v544
        %v560 = vmul.f32 %v528, %v544
        %v561 = vmul.f32 %v529, %v544
        %v562 = vadd.f32 %v546, %v550
        %v563 = vadd.f32 %v562, %v554
        %v564 = vadd.f32 %v563, %v558
        %v565 = vrot.slane %v564, 4
        %v566 = vadd.f32 %v564, %v565
        %v567 = vrot.slane %v566, 2
        %v568 = vadd.f32 %v566, %v567
        %v569 = vrot.slane %v568, 1
        %v570 = vadd.f32 %v568, %v569
        %v571 = vadd.f32 %v547, %v551
        %v572 = vadd.f32 %v571, %v555
        %v573 = vadd.f32 %v572, %v559
        %v574 = vrot.slane %v573, 4
        %v575 = vadd.f32 %v573, %v574
        %v576 = vrot.slane %v575, 2
        %v577 = vadd.f32 %v575, %v576
        %v578 = vrot.slane %v577, 1
        %v579 = vadd.f32 %v577, %v578
        %v580 = vadd.f32 %v548, %v552
        %v581 = vadd.f32 %v580, %v556
        %v582 = vadd.f32 %v581, %v560
        %v583 = vrot.slane %v582, 4
        %v584 = vadd.f32 %v582, %v583
        %v585 = vrot.slane %v584, 2
        %v586 = vadd.f32 %v584, %v585
        %v587 = vrot.slane %v586, 1
        %v588 = vadd.f32 %v586, %v587
        %v589 = vadd.f32 %v549, %v553
        %v590 = vadd.f32 %v589, %v557
        %v591 = vadd.f32 %v590, %v561
        %v592 = vrot.slane %v591, 4
        %v593 = vadd.f32 %v591, %v592
        %v594 = vrot.slane %v593, 2
        %v595 = vadd.f32 %v593, %v594
        %v596 = vrot.slane %v595, 1
        %v597 = vadd.f32 %v595, %v596
        %598 = vset.pattern.permute.xlu0 4
        %599 = vperm.xlu0 %598, %v194
        %v600 = vpop.permute.xlu0 %599
        %v602 = vadd.f32 %v570, %v600
        %v603 = vadd.f32 %v579, %v600
        %v604 = vadd.f32 %v588, %v600
        %v605 = vadd.f32 %v597, %v600
        %v610 = vcombine.low %v602, %v603
        %v611 = vcombine.low %v604, %v605
        %v613 = vunpack.c.l.s4 1966171168
        %v614 = vunpack.c.0.s8 %v613
        %v615 = vlaneseq
        %v616 = vshrl.u32 %v615, 7
        %v617 = vsub.s32 %v614, %v616
        %v618 = vrot.slane %v610, %v617
        %v620 = vunpack.c.l.s4 1966171168
        %v621 = vunpack.c.0.s8 %v620
        %v622 = vlaneseq
        %v623 = vshrl.u32 %v622, 7
        %v624 = vsub.s32 %v621, %v623
        %v625 = vrot.slane %v611, %v624
        %v626 = vcombine.low %v618, %v625
        %v628 = vunpack.c.l.s4 1966171168
        %v629 = vunpack.c.0.s8 %v628
        %v630 = vlaneseq
        %v631 = vshrl.u32 %v630, 7
        %v632 = vsub.s32 %v629, %v631
        %v633 = vrot.slane %v626, %v632
        %v635 = vlaneseq
        %vm636 = vcmp.ge.s32.totalorder %v635, 0
        %vm637 = vcmp.lt.s32.totalorder %v635, 512
        %vm638 = vmand %vm636, %vm637
        %639 = vst.msk [vmem:[%s174] sm:$0xf] %vm638, %v633
        %s640 = sand.u32 %s93, 1
        %s641 = scalar_lea.sflag [#allocation3], %s640
        %s642 = sand.u32 %s93, 1
        %s643 = smul.addr %s642, 4
        %s644 = scalar_lea.vmem [#allocation2], %s643
        // Predicated region
        $region33: #{actor_forward.1} parent=31 // pred_check
          %p645 = pneg %p103
        $region34: #{actor_forward.1} parent=31 // pred_check_branch
          %647 = sbr.rel (%p645) target = $region36
        $region35: #{actor_forward.1} parent=31 // pred_region
          %s648 = smul.u32 4, %s17
          %s649 = ssub.s32 5, %s648
          %p650 = scmp.lt.s32.totalorder %s649, 4
          %s651 = scalar_select %p650, %s649, 4
          %s652 = smul.u32 16, %s651
          %s654 = ssub.s32 64, %s652
          %655 = vsyncadd %s641, %s654
          %p656 = scmp.ne.s32.totalorder 0, %s652
          %s657 = smul.addr %s648, 16
          %s658 = scalar_lea.hbm %s3, %s657
          %s659 = sshll.u32 %s651, 4
          %s660 = sshll.u32 %s644, 4
          %s661 = int_to_ptr.vmem [resolvable:$true] %s660
          %663 = dma.vmem_to_hbm [thread:$0]  (%p656), %s661, %s659, %s658, %s641
        $region36: #{actor_forward.1} parent=31 // pred_fallthru
          _
      $region32: #{actor_forward.1} parent=5 // pred_fallthru
        _
      %p664 = scmp.le.s32.totalorder 2, %s12
      // Predicated region
      $region37: #{actor_forward.1} parent=5 // pred_check
        %p665 = pneg %p664
      $region38: #{actor_forward.1} parent=5 // pred_check_branch
        %667 = sbr.rel (%p665) target = $region40
      $region39: #{actor_forward.1} parent=5 // pred_region
        %s668 = ssub.s32 %s12, 2
        // Predicated region
        $region41: #{actor_forward.1} parent=39 // pred_check
          %p669 = pneg %p109
        $region42: #{actor_forward.1} parent=39 // pred_check_branch
          %671 = sbr.rel (%p669) target = $region44
        $region43: #{actor_forward.1} parent=39 // pred_region
          %s672 = sand.u32 %s94, 1
          %s673 = scalar_lea.sflag [#allocation3], %s672
          %s674 = sand.u32 %s94, 1
          %s675 = smul.addr %s674, 4
          %s676 = scalar_lea.vmem [#allocation2], %s675
          %677 = dma.done %s673, 64
        $region44: #{actor_forward.1} parent=39 // pred_fallthru
          _
      $region40: #{actor_forward.1} parent=5 // pred_fallthru
        _
    $region6: #{actor_forward.1} parent=1 // loop_footer
      %s16 = sadd.s32 1, %s12
    $region7: #{actor_forward.1} parent=1 // loop_footer_branch
      %11 = sbr.rel target = $region3
    $region8: #{actor_forward.1} parent=1 // loop_exit
      _
    %678 = vsyncpa [#allocation3], 1
    %s679 = scalar_lea.sflag [#allocation3], 1
    %680 = vsyncpa %s679, 1

</llo_original>
